<compile_context>
chip_gen: v5e
topology: v5e:2x2
jax: 0.10.0
libtpu: 0.0.40
codegen_flags: <defaults>
</compile_context>

<pallas_src>
import functools

import numpy as np
import jax
import jax.numpy as jnp
from jax import lax
from jax.experimental import pallas as pl
from jax.experimental.pallas import tpu as pltpu


def transition_kernel(x_ref, w_ref, shift_ref, pw_ref, eye_ref, o_ref, *,
                      tile_h, width):
    # x_ref:     (1, Cin, TH*W)    channel-major row-group of one image
    # w_ref:     (Cin, Cout)       conv weight with BN scale folded in
    # shift_ref: (1, Cout)         folded BN shift
    # pw_ref:    (Wo, 2*W)         2x2 average-pool weights (0.25 entries)
    # eye_ref:   (Cout, Cout)      identity, used as an MXU layout transpose
    # o_ref:     (1, Cout, THo*Wo) pooled output row-group, flattened NCHW
    W = width
    Wo = W // 2
    THo = tile_h // 2

    x = x_ref[0]                                              # (Cin, TH*W)
    # 1x1 conv: contract Cin directly from the channel-major layout.
    y = lax.dot_general(x, w_ref[...],
                        dimension_numbers=(((0,), (0,)), ((), ())),
                        preferred_element_type=jnp.float32)   # (TH*W, Cout)
    y = jnp.maximum(y + shift_ref[...], 0.0)                  # BN shift + ReLU

    pw = pw_ref[...]                                          # (Wo, 2W)
    rows = []
    for i in range(THo):
        # One pool-window row-pair: contiguous slice of two image rows.
        pair = y[i * 2 * W:(i + 1) * 2 * W, :]                # (2W, Cout)
        rows.append(jnp.dot(pw, pair,
                            preferred_element_type=jnp.float32))  # (Wo, Cout)
    pooled = jnp.concatenate(rows, axis=0)                    # (THo*Wo, Cout)

    # Layout-only transpose via identity matmul (MXU has slack in this
    # memory-bound kernel) so the store is channel-major NCHW and lane-dense.
    pooled_t = lax.dot_general(eye_ref[...], pooled,
                               dimension_numbers=(((1,), (1,)), ((), ())),
                               preferred_element_type=jnp.float32)  # (Cout, THo*Wo)
    o_ref[0] = pooled_t.astype(o_ref.dtype)


def _make_pool_mat(W):
    """(Wo, 2W) matrix: out[o] = 0.25 * (row0[2o] + row0[2o+1] + row1[2o] + row1[2o+1])."""
    Wo = W // 2
    cols = jnp.arange(2 * W)
    rows = jnp.arange(Wo)
    hit = ((cols % W)[None, :] // 2) == rows[:, None]
    return jnp.where(hit, 0.25, 0.0).astype(jnp.float32)


def _pick_tile_rows(H, W, target_elems=1024):
    """Largest sensible even row-group TH.

    Requires (TH*W) % 512 == 0 (so both the input block TH*W and the output
    block THo*Wo are 128-lane aligned) or TH == H (full dims are always legal).
    """
    best, best_gap = H, abs(H * W - target_elems)
    for th in range(2, H, 2):
        if H % th:
            continue
        if (th * W) % 512 != 0:
            continue
        gap = abs(th * W - target_elems)
        if gap < best_gap:
            best, best_gap = th, gap
    return best


def transition_block(x_nchw, conv_w, gamma, beta, running_mean, running_var,
                     eps=1e-5, tile_rows=None):
    N, Cin, H, W = x_nchw.shape
    Cout = conv_w.shape[0]
    assert H % 2 == 0 and W % 2 == 0, "AvgPool2d(2,2) kernel assumes even H, W"
    Ho, Wo = H // 2, W // 2

    TH = _pick_tile_rows(H, W) if tile_rows is None else tile_rows
    assert TH % 2 == 0 and H % TH == 0
    THo = TH // 2
    assert (TH * W) % 128 == 0 or TH == H
    assert (THo * Wo) % 128 == 0 or TH == H
    n_row_tiles = H // TH

    # Free (metadata-only) reshape: NCHW -> (N, Cin, H*W). No transpose.
    x_flat = x_nchw.reshape(N, Cin, H * W)

    # Fold BN (eval mode) scale into the conv weight; keep only the shift.
    inv_std = lax.rsqrt(running_var.astype(jnp.float32) + eps)
    scale = gamma.astype(jnp.float32) * inv_std                      # (Cout,)
    shift = beta.astype(jnp.float32) - running_mean.astype(jnp.float32) * scale

    # Mixed precision: bf16 matmul operands iff x is bf16; f32 accumulation.
    mm_dtype = jnp.bfloat16 if x_nchw.dtype == jnp.bfloat16 else jnp.float32
    w2 = conv_w.reshape(Cout, Cin).astype(jnp.float32)
    w_folded = (w2 * scale[:, None]).T.astype(mm_dtype)              # (Cin, Cout)
    shift2 = shift.reshape(1, Cout)

    pw = _make_pool_mat(W)                                           # (Wo, 2W)
    eye_c = jnp.eye(Cout, dtype=jnp.float32)                         # (Cout, Cout)

    out_dtype = x_nchw.dtype
    itemsize = jnp.dtype(out_dtype).itemsize
    cost = pl.CostEstimate(
        flops=(2 * N * H * W * Cin * Cout                    # 1x1 conv
               + 2 * N * Ho * Wo * 2 * W * Cout              # pooling matmuls
               + 2 * N * n_row_tiles * Cout * Cout * THo * Wo),  # layout matmul
        transcendentals=0,
        bytes_accessed=(x_flat.size * jnp.dtype(x_flat.dtype).itemsize
                        + w_folded.size * jnp.dtype(mm_dtype).itemsize
                        + shift2.size * 4 + pw.size * 4 + eye_c.size * 4
                        + N * Cout * Ho * Wo * itemsize))

    kernel = functools.partial(transition_kernel, tile_h=TH, width=W)

    out_flat = pl.pallas_call(
        kernel,
        out_shape=jax.ShapeDtypeStruct((N, Cout, Ho * Wo), out_dtype),
        grid=(N, n_row_tiles),
        in_specs=[
            pl.BlockSpec((1, Cin, TH * W), lambda n, t: (n, 0, t)),
            pl.BlockSpec((Cin, Cout), lambda n, t: (0, 0)),
            pl.BlockSpec((1, Cout), lambda n, t: (0, 0)),
            pl.BlockSpec((Wo, 2 * W), lambda n, t: (0, 0)),
            pl.BlockSpec((Cout, Cout), lambda n, t: (0, 0)),
        ],
        out_specs=pl.BlockSpec((1, Cout, THo * Wo), lambda n, t: (n, 0, t)),
        compiler_params=pltpu.CompilerParams(
            dimension_semantics=("parallel", "parallel"),
            vmem_limit_bytes=32 * 1024 * 1024),
        cost_estimate=cost,
    )(x_flat, w_folded, shift2, pw, eye_c)

    # Kernel already wrote channel-major (NCHW) data; only a free reshape left.
    return out_flat.reshape(N, Cout, Ho, Wo)


def reference(x_nchw, conv_w, gamma, beta, running_mean, running_var, eps=1e-5):
    """Pure-JAX reference for correctness check."""
    N, Cin, H, W = x_nchw.shape
    Cout = conv_w.shape[0]
    w = conv_w.reshape(Cout, Cin)
    y = jnp.einsum('nchw,oc->nohw', x_nchw, w)
    inv_std = 1.0 / jnp.sqrt(running_var + eps)
    y = y * (gamma * inv_std)[None, :, None, None] + \
        (beta - running_mean * gamma * inv_std)[None, :, None, None]
    y = jnp.maximum(y, 0.0)
    y = y.reshape(N, Cout, H // 2, 2, W // 2, 2).mean(axis=(3, 5))
    return y


def _make_inputs(key, N, Cin, H, W):
    Cout = Cin // 2
    k1, k2, k3, k4, k5, k6 = jax.random.split(key, 6)
    x = jax.random.normal(k1, (N, Cin, H, W), dtype=jnp.float32)
    conv_w = jax.random.normal(k2, (Cout, Cin, 1, 1), dtype=jnp.float32) * 0.1
    gamma = jax.random.normal(k3, (Cout,), dtype=jnp.float32) * 0.1 + 1.0
    beta = jax.random.normal(k4, (Cout,), dtype=jnp.float32) * 0.1
    running_mean = jax.random.normal(k5, (Cout,), dtype=jnp.float32) * 0.1
    running_var = jnp.abs(jax.random.normal(k6, (Cout,), dtype=jnp.float32)) + 0.5
    return x, conv_w, gamma, beta, running_mean, running_var


if __name__ == "__main__":
    key = jax.random.PRNGKey(0)
    ka, kb = jax.random.split(key)

    # Test 1: small DenseNet-like shapes, auto-picked (single) spatial tile.
    args1 = _make_inputs(ka, N=2, Cin=4, H=16, W=16)
    ref1 = reference(*args1)
    out1 = jax.block_until_ready(transition_block(*args1))
    assert out1.shape == (2, 2, 8, 8), out1.shape
    np.testing.assert_allclose(np.asarray(out1), np.asarray(ref1),
                               rtol=1e-5, atol=1e-5)

    # Test 2: forced multi-tile spatial grid (exercises the row-group index
    # maps and the 128-lane-aligned flattened NCHW output blocks).
    args2 = _make_inputs(kb, N=2, Cin=8, H=32, W=32)
    ref2 = reference(*args2)
    out2 = jax.block_until_ready(transition_block(*args2, tile_rows=16))
    assert out2.shape == (2, 4, 16, 16), out2.shape
    np.testing.assert_allclose(np.asarray(out2), np.asarray(ref2),
                               rtol=1e-5, atol=1e-5)

    print("KERNEL_OK")
</pallas_src>

<mosaic_0001>
module attributes {stable_mosaic.version = 11 : i64} {
  func.func @transition_kernel(%arg0: i32, %arg1: i32, %arg2: memref<1x4x256xf32, #tpu.memory_space<vmem>>, %arg3: memref<4x2xf32, #tpu.memory_space<vmem>>, %arg4: memref<1x2xf32, #tpu.memory_space<vmem>>, %arg5: memref<8x32xf32, #tpu.memory_space<vmem>>, %arg6: memref<2x2xf32, #tpu.memory_space<vmem>>, %arg7: memref<1x2x64xf32, #tpu.memory_space<vmem>>) attributes {dimension_semantics = [#tpu.dimension_semantics<parallel>, #tpu.dimension_semantics<parallel>], iteration_bounds = array<i64: 2, 1>, scalar_prefetch = 0 : i64, scratch_operands = 0 : i64, tpu.core_type = #tpu.core_type<tc>, window_params = [{transform_indices = @transform_0, window_bounds = array<i64: 1, 4, 256>}, {pipeline_mode = #tpu.pipeline_mode<synchronous>, transform_indices = @transform_1, window_bounds = array<i64: 4, 2>}, {pipeline_mode = #tpu.pipeline_mode<synchronous>, transform_indices = @transform_2, window_bounds = array<i64: 1, 2>}, {pipeline_mode = #tpu.pipeline_mode<synchronous>, transform_indices = @transform_3, window_bounds = array<i64: 8, 32>}, {pipeline_mode = #tpu.pipeline_mode<synchronous>, transform_indices = @transform_4, window_bounds = array<i64: 2, 2>}, {transform_indices = @transform_5, window_bounds = array<i64: 1, 2, 64>}]} {
    %c0 = arith.constant 0 : index
    %c0_0 = arith.constant 0 : index
    %c0_1 = arith.constant 0 : index
    %0 = vector.load %arg2[%c0, %c0_0, %c0_1] : memref<1x4x256xf32, #tpu.memory_space<vmem>>, vector<1x4x256xf32>
    %1 = vector.shape_cast %0 : vector<1x4x256xf32> to vector<4x256xf32>
    %c0_2 = arith.constant 0 : index
    %c0_3 = arith.constant 0 : index
    %2 = vector.load %arg3[%c0_2, %c0_3] : memref<4x2xf32, #tpu.memory_space<vmem>>, vector<4x2xf32>
    %cst = arith.constant dense<0.000000e+00> : vector<256x2xf32>
    %3 = tpu.matmul %1, %2, %cst {dimension_numbers = #tpu.dot_dimension_numbers<[0], [0], [1], [1], [0, 1, 1, 1], [], []>} : vector<4x256xf32>, vector<4x2xf32>, vector<256x2xf32> -> vector<256x2xf32>
    %c0_4 = arith.constant 0 : index
    %c0_5 = arith.constant 0 : index
    %4 = vector.load %arg4[%c0_4, %c0_5] : memref<1x2xf32, #tpu.memory_space<vmem>>, vector<1x2xf32>
    %5 = vector.broadcast %4 : vector<1x2xf32> to vector<256x2xf32>
    %6 = arith.addf %3, %5 : vector<256x2xf32>
    %cst_6 = arith.constant 0.000000e+00 : f32
    %7 = vector.broadcast %cst_6 : f32 to vector<256x2xf32>
    %8 = arith.maximumf %6, %7 : vector<256x2xf32>
    %c0_7 = arith.constant 0 : index
    %c0_8 = arith.constant 0 : index
    %9 = vector.load %arg5[%c0_7, %c0_8] : memref<8x32xf32, #tpu.memory_space<vmem>>, vector<8x32xf32>
    %10 = vector.extract_strided_slice %8 {offsets = [0, 0], sizes = [32, 2], strides = [1, 1]} : vector<256x2xf32> to vector<32x2xf32>
    %cst_9 = arith.constant dense<0.000000e+00> : vector<8x2xf32>
    %11 = tpu.matmul %9, %10, %cst_9 {dimension_numbers = #tpu.dot_dimension_numbers<[1], [0], [0], [1], [0, 0, 1, 1], [], []>} : vector<8x32xf32>, vector<32x2xf32>, vector<8x2xf32> -> vector<8x2xf32>
    %12 = vector.extract_strided_slice %8 {offsets = [32, 0], sizes = [32, 2], strides = [1, 1]} : vector<256x2xf32> to vector<32x2xf32>
    %cst_10 = arith.constant dense<0.000000e+00> : vector<8x2xf32>
    %13 = tpu.matmul %9, %12, %cst_10 {dimension_numbers = #tpu.dot_dimension_numbers<[1], [0], [0], [1], [0, 0, 1, 1], [], []>} : vector<8x32xf32>, vector<32x2xf32>, vector<8x2xf32> -> vector<8x2xf32>
    %14 = vector.extract_strided_slice %8 {offsets = [64, 0], sizes = [32, 2], strides = [1, 1]} : vector<256x2xf32> to vector<32x2xf32>
    %cst_11 = arith.constant dense<0.000000e+00> : vector<8x2xf32>
    %15 = tpu.matmul %9, %14, %cst_11 {dimension_numbers = #tpu.dot_dimension_numbers<[1], [0], [0], [1], [0, 0, 1, 1], [], []>} : vector<8x32xf32>, vector<32x2xf32>, vector<8x2xf32> -> vector<8x2xf32>
    %16 = vector.extract_strided_slice %8 {offsets = [96, 0], sizes = [32, 2], strides = [1, 1]} : vector<256x2xf32> to vector<32x2xf32>
    %cst_12 = arith.constant dense<0.000000e+00> : vector<8x2xf32>
    %17 = tpu.matmul %9, %16, %cst_12 {dimension_numbers = #tpu.dot_dimension_numbers<[1], [0], [0], [1], [0, 0, 1, 1], [], []>} : vector<8x32xf32>, vector<32x2xf32>, vector<8x2xf32> -> vector<8x2xf32>
    %18 = vector.extract_strided_slice %8 {offsets = [128, 0], sizes = [32, 2], strides = [1, 1]} : vector<256x2xf32> to vector<32x2xf32>
    %cst_13 = arith.constant dense<0.000000e+00> : vector<8x2xf32>
    %19 = tpu.matmul %9, %18, %cst_13 {dimension_numbers = #tpu.dot_dimension_numbers<[1], [0], [0], [1], [0, 0, 1, 1], [], []>} : vector<8x32xf32>, vector<32x2xf32>, vector<8x2xf32> -> vector<8x2xf32>
    %20 = vector.extract_strided_slice %8 {offsets = [160, 0], sizes = [32, 2], strides = [1, 1]} : vector<256x2xf32> to vector<32x2xf32>
    %cst_14 = arith.constant dense<0.000000e+00> : vector<8x2xf32>
    %21 = tpu.matmul %9, %20, %cst_14 {dimension_numbers = #tpu.dot_dimension_numbers<[1], [0], [0], [1], [0, 0, 1, 1], [], []>} : vector<8x32xf32>, vector<32x2xf32>, vector<8x2xf32> -> vector<8x2xf32>
    %22 = vector.extract_strided_slice %8 {offsets = [192, 0], sizes = [32, 2], strides = [1, 1]} : vector<256x2xf32> to vector<32x2xf32>
    %cst_15 = arith.constant dense<0.000000e+00> : vector<8x2xf32>
    %23 = tpu.matmul %9, %22, %cst_15 {dimension_numbers = #tpu.dot_dimension_numbers<[1], [0], [0], [1], [0, 0, 1, 1], [], []>} : vector<8x32xf32>, vector<32x2xf32>, vector<8x2xf32> -> vector<8x2xf32>
    %24 = vector.extract_strided_slice %8 {offsets = [224, 0], sizes = [32, 2], strides = [1, 1]} : vector<256x2xf32> to vector<32x2xf32>
    %cst_16 = arith.constant dense<0.000000e+00> : vector<8x2xf32>
    %25 = tpu.matmul %9, %24, %cst_16 {dimension_numbers = #tpu.dot_dimension_numbers<[1], [0], [0], [1], [0, 0, 1, 1], [], []>} : vector<8x32xf32>, vector<32x2xf32>, vector<8x2xf32> -> vector<8x2xf32>
    %26 = tpu.concatenate %11, %13, %15, %17, %19, %21, %23, %25 in 0 : vector<8x2xf32>, vector<8x2xf32>, vector<8x2xf32>, vector<8x2xf32>, vector<8x2xf32>, vector<8x2xf32>, vector<8x2xf32>, vector<8x2xf32> -> vector<64x2xf32>
    %c0_17 = arith.constant 0 : index
    %c0_18 = arith.constant 0 : index
    %27 = vector.load %arg6[%c0_17, %c0_18] : memref<2x2xf32, #tpu.memory_space<vmem>>, vector<2x2xf32>
    %cst_19 = arith.constant dense<0.000000e+00> : vector<2x64xf32>
    %28 = tpu.matmul %27, %26, %cst_19 {dimension_numbers = #tpu.dot_dimension_numbers<[1], [1], [0], [0], [0, 0, 1, 0], [], []>} : vector<2x2xf32>, vector<64x2xf32>, vector<2x64xf32> -> vector<2x64xf32>
    %c0_20 = arith.constant 0 : index
    %c0_21 = arith.constant 0 : index
    %c0_22 = arith.constant 0 : index
    %29 = vector.load %arg7[%c0_20, %c0_21, %c0_22] : memref<1x2x64xf32, #tpu.memory_space<vmem>>, vector<1x2x64xf32>
    %30 = vector.shape_cast %29 : vector<1x2x64xf32> to vector<2x64xf32>
    %31 = vector.shape_cast %28 : vector<2x64xf32> to vector<1x2x64xf32>
    tpu.vector_store %arg7[%c0_20, %c0_21, %c0_22], %31 {strides = array<i32>} : memref<1x2x64xf32, #tpu.memory_space<vmem>>, vector<1x2x64xf32>,
    return
  }
  func.func @transform_0(%arg0: i32, %arg1: i32) -> (i32, i32, i32) {
    %c0_i32 = arith.constant 0 : i32
    %c0_i32_0 = arith.constant 0 : i32
    return %arg0, %c0_i32, %arg1 : i32, i32, i32
  }
  func.func @transform_1(%arg0: i32, %arg1: i32) -> (i32, i32) {
    %c0_i32 = arith.constant 0 : i32
    %c0_i32_0 = arith.constant 0 : i32
    %c0_i32_1 = arith.constant 0 : i32
    return %c0_i32, %c0_i32_0 : i32, i32
  }
  func.func @transform_2(%arg0: i32, %arg1: i32) -> (i32, i32) {
    %c0_i32 = arith.constant 0 : i32
    %c0_i32_0 = arith.constant 0 : i32
    %c0_i32_1 = arith.constant 0 : i32
    return %c0_i32, %c0_i32_0 : i32, i32
  }
  func.func @transform_3(%arg0: i32, %arg1: i32) -> (i32, i32) {
    %c0_i32 = arith.constant 0 : i32
    %c0_i32_0 = arith.constant 0 : i32
    %c0_i32_1 = arith.constant 0 : i32
    return %c0_i32, %c0_i32_0 : i32, i32
  }
  func.func @transform_4(%arg0: i32, %arg1: i32) -> (i32, i32) {
    %c0_i32 = arith.constant 0 : i32
    %c0_i32_0 = arith.constant 0 : i32
    %c0_i32_1 = arith.constant 0 : i32
    return %c0_i32, %c0_i32_0 : i32, i32
  }
  func.func @transform_5(%arg0: i32, %arg1: i32) -> (i32, i32, i32) {
    %c0_i32 = arith.constant 0 : i32
    %c0_i32_0 = arith.constant 0 : i32
    return %arg0, %c0_i32, %arg1 : i32, i32, i32
  }
}

</mosaic_0001>

<llo_original>
// kernel: tpu_custom_call.1
$region0: #{tpu_custom_call.1}
  #allocation0 [shape = 'u32[]', space=smem, size = 0x4, offset = 0x4, fixed_abs, tag = 'smem constant byte address 0x4 - core index']
  #allocation1 [shape = 'u32[72,128]{1,0:T(1,128)}', space=vmem, size = 0x9000, scoped, tag = 'internal scratch']
  %s0 = inlined_call_operand.hbm [shape: f32[2,4,256], index: 0, kind: input, shape index: {}]
  %s1 = inlined_call_operand.vmem [shape: f32[4,2], index: 1, kind: input, shape index: {}]
  %s2 = inlined_call_operand.hbm [shape: f32[1,2], index: 2, kind: input, shape index: {}]
  %s3 = inlined_call_operand.vmem [shape: f32[8,32], index: 3, kind: input, shape index: {}]
  %s4 = inlined_call_operand.hbm [shape: f32[2,2], index: 4, kind: input, shape index: {}]
  %s5 = inlined_call_operand.hbm [shape: f32[2,2,64], index: 5, kind: output, shape index: {}]
  %s6 = sld [smem:[#allocation0]]
  $region65: #{tpu_custom_call.1} parent=0
    _
  %s8 = ssub.s32 1, %s6
  %s9 = scalar_select 0, %s8, %s6
  $region1: #{tpu_custom_call.1} parent=0
    #allocation2 [shape = 'u8[8192]{0}', space=vmem, size = 0x2000, scoped, tag = 'input window, operand 0']
    #allocation3 [shape = 's32[2]{0}', space=sflag, size = 0x8, scoped, tag = 'scoped memory for tpu_custom_call.1']
    #allocation4 [shape = 's32[2]{0}', space=sflag, size = 0x8, scoped, tag = 'scoped memory for tpu_custom_call.1']
    #allocation5 [shape = 'u8[512]{0}', space=vmem, size = 0x400, scoped, tag = 'input window, operand 2, single buffered']
    #allocation6 [shape = 's32[1]{0}', space=sflag, size = 0x4, scoped, tag = 'scoped memory for tpu_custom_call.1']
    #allocation7 [shape = 'u8[1024]{0}', space=vmem, size = 0x400, scoped, tag = 'input window, operand 4, single buffered']
    #allocation8 [shape = 'u8[2048]{0}', space=vmem, size = 0x800, scoped, tag = 'output window, operand 0']
    %10 = vsyncpa [#allocation3], 0
    %s11 = scalar_lea.sflag [#allocation3], 1
    %12 = vsyncpa %s11, 0
    %13 = vsyncpa [#allocation6], 0
    %14 = vsyncpa [#allocation4], 0
    %s15 = scalar_lea.sflag [#allocation4], 1
    %16 = vsyncpa %s15, 0
    loop: start=0, step=1, limit=4
    $region2: #{tpu_custom_call.1} parent=1 // loop_pre_header
      _
    $region3: #{tpu_custom_call.1} parent=1 // loop_header
      %s18 = sphi 0, %s22
      %p19 = scmp.ge.s32.totalorder %s18, 4
      %s25 = sphi 0, %s37
      %s26 = sphi 0, %s33
      %s27 = sphi 0, %s25
      %s28 = sphi 0, %s26
      %s29 = sphi 0, %s27
      %s30 = sphi 0, %s28
      %s42 = sphi 0, %s44
      %s45 = sphi 0, %s42
      %s46 = sphi 0, %s45
      %s62 = sphi 0, %s46
      %s66 = sphi 0, %s66
      %s68 = sphi 0, %s66
      %s69 = sphi 0, %s68
      %s83 = sphi 0, %s69
      %s87 = sphi 0, %s87
      %s89 = sphi 0, %s87
      %s90 = sphi 0, %s89
      %s104 = sphi 0, %s90
      %s108 = sphi 0, %s108
      %s110 = sphi 0, %s108
      %s111 = sphi 0, %s110
      %s125 = sphi 0, %s111
      %s129 = sphi 0, %s129
      %s131 = sphi 0, %s129
      %s132 = sphi 0, %s131
      %s146 = sphi 0, %s132
      %s154 = sphi 0, %s156
      %s157 = sphi 0, %s154
      %s158 = sphi 0, %s157
      %s174 = sphi 0, %s158
    $region4: #{tpu_custom_call.1} parent=1 // loop_header_branch
      %21 = sbr.rel (%p19) target = $region8
    $region5: #{tpu_custom_call.1} parent=1 // loop_body
      %s23 = ssub.s32 %s18, 1
      %s24 = ssub.s32 %s18, 2
      %s31 = sadd.s32 1, %s26
      %p32 = scmp.ge.s32.totalorder %s31, 1
      %s33 = scalar_select %p32, 0, %s31
      %s34 = sadd.s32 1, %s25
      %s35 = scalar_select %p32, %s34, %s25
      %p36 = scmp.ge.s32.totalorder %s35, 2
      %s37 = scalar_select %p36, 0, %s35
      %s38 = ssub.s32 %s25, %s37
      %s39 = ssub.s32 %s26, %s33
      %s40 = sor.u32 %s38, %s39
      %p41 = scmp.eq.s32.totalorder %s40, 0
      %s43 = sadd.s32 %s42, 1
      %s44 = scalar_select %p41, %s42, %s43
      %p47 = pneg %p41
      %p48 = scmp.eq.s32.totalorder %s18, 1
      %p49 = por %p47, %p48
      %p50 = scmp.ne.s32.totalorder %s42, %s45
      %p51 = scmp.eq.s32.totalorder %s18, 0
      %p52 = por %p50, %p51
      %p53 = scmp.ne.s32.totalorder %s42, %s45
      %p54 = scmp.eq.s32.totalorder %s23, 1
      %p55 = por %p53, %p54
      %p56 = scmp.ne.s32.totalorder %s45, %s46
      %p57 = scmp.eq.s32.totalorder %s23, 0
      %p58 = por %p56, %p57
      %p59 = scmp.ne.s32.totalorder %s45, %s46
      %p60 = scmp.eq.s32.totalorder %s24, 1
      %p61 = por %p59, %p60
      %p63 = scmp.ne.s32.totalorder %s46, %s62
      %p64 = scmp.eq.s32.totalorder %s24, 0
      %p65 = por %p63, %p64
      %s67 = sadd.s32 %s66, 1
      %p70 = scmp.eq.s32.totalorder %s18, 1
      %p71 = scmp.ne.s32.totalorder %s66, %s68
      %p72 = scmp.eq.s32.totalorder %s18, 0
      %p73 = por %p71, %p72
      %p74 = scmp.ne.s32.totalorder %s66, %s68
      %p75 = scmp.eq.s32.totalorder %s23, 1
      %p76 = por %p74, %p75
      %p77 = scmp.ne.s32.totalorder %s68, %s69
      %p78 = scmp.eq.s32.totalorder %s23, 0
      %p79 = por %p77, %p78
      %p80 = scmp.ne.s32.totalorder %s68, %s69
      %p81 = scmp.eq.s32.totalorder %s24, 1
      %p82 = por %p80, %p81
      %p84 = scmp.ne.s32.totalorder %s69, %s83
      %p85 = scmp.eq.s32.totalorder %s24, 0
      %p86 = por %p84, %p85
      %s88 = sadd.s32 %s87, 1
      %p91 = scmp.eq.s32.totalorder %s18, 1
      %p92 = scmp.ne.s32.totalorder %s87, %s89
      %p93 = scmp.eq.s32.totalorder %s18, 0
      %p94 = por %p92, %p93
      %p95 = scmp.ne.s32.totalorder %s87, %s89
      %p96 = scmp.eq.s32.totalorder %s23, 1
      %p97 = por %p95, %p96
      %p98 = scmp.ne.s32.totalorder %s89, %s90
      %p99 = scmp.eq.s32.totalorder %s23, 0
      %p100 = por %p98, %p99
      %p101 = scmp.ne.s32.totalorder %s89, %s90
      %p102 = scmp.eq.s32.totalorder %s24, 1
      %p103 = por %p101, %p102
      %p105 = scmp.ne.s32.totalorder %s90, %s104
      %p106 = scmp.eq.s32.totalorder %s24, 0
      %p107 = por %p105, %p106
      %s109 = sadd.s32 %s108, 1
      %p112 = scmp.eq.s32.totalorder %s18, 1
      %p113 = scmp.ne.s32.totalorder %s108, %s110
      %p114 = scmp.eq.s32.totalorder %s18, 0
      %p115 = por %p113, %p114
      %p116 = scmp.ne.s32.totalorder %s108, %s110
      %p117 = scmp.eq.s32.totalorder %s23, 1
      %p118 = por %p116, %p117
      %p119 = scmp.ne.s32.totalorder %s110, %s111
      %p120 = scmp.eq.s32.totalorder %s23, 0
      %p121 = por %p119, %p120
      %p122 = scmp.ne.s32.totalorder %s110, %s111
      %p123 = scmp.eq.s32.totalorder %s24, 1
      %p124 = por %p122, %p123
      %p126 = scmp.ne.s32.totalorder %s111, %s125
      %p127 = scmp.eq.s32.totalorder %s24, 0
      %p128 = por %p126, %p127
      %s130 = sadd.s32 %s129, 1
      %p133 = scmp.eq.s32.totalorder %s18, 1
      %p134 = scmp.ne.s32.totalorder %s129, %s131
      %p135 = scmp.eq.s32.totalorder %s18, 0
      %p136 = por %p134, %p135
      %p137 = scmp.ne.s32.totalorder %s129, %s131
      %p138 = scmp.eq.s32.totalorder %s23, 1
      %p139 = por %p137, %p138
      %p140 = scmp.ne.s32.totalorder %s131, %s132
      %p141 = scmp.eq.s32.totalorder %s23, 0
      %p142 = por %p140, %p141
      %p143 = scmp.ne.s32.totalorder %s131, %s132
      %p144 = scmp.eq.s32.totalorder %s24, 1
      %p145 = por %p143, %p144
      %p147 = scmp.ne.s32.totalorder %s132, %s146
      %p148 = scmp.eq.s32.totalorder %s24, 0
      %p149 = por %p147, %p148
      %s150 = ssub.s32 %s25, %s37
      %s151 = ssub.s32 %s26, %s33
      %s152 = sor.u32 %s150, %s151
      %p153 = scmp.eq.s32.totalorder %s152, 0
      %s155 = sadd.s32 %s154, 1
      %s156 = scalar_select %p153, %s154, %s155
      %p159 = pneg %p153
      %p160 = scmp.eq.s32.totalorder %s18, 1
      %p161 = por %p159, %p160
      %p162 = scmp.ne.s32.totalorder %s154, %s157
      %p163 = scmp.eq.s32.totalorder %s18, 0
      %p164 = por %p162, %p163
      %p165 = scmp.ne.s32.totalorder %s154, %s157
      %p166 = scmp.eq.s32.totalorder %s23, 1
      %p167 = por %p165, %p166
      %p168 = scmp.ne.s32.totalorder %s157, %s158
      %p169 = scmp.eq.s32.totalorder %s23, 0
      %p170 = por %p168, %p169
      %p171 = scmp.ne.s32.totalorder %s157, %s158
      %p172 = scmp.eq.s32.totalorder %s24, 1
      %p173 = por %p171, %p172
      %p175 = scmp.ne.s32.totalorder %s158, %s174
      %p176 = scmp.eq.s32.totalorder %s24, 0
      %p177 = por %p175, %p176
      %p178 = scmp.le.s32.totalorder 1, %s18
      %p179 = scmp.lt.s32.totalorder %s18, 3
      %p180 = pnand %p178, %p179
      %p181 = pneg %p180
      // Predicated region
      $region9: #{tpu_custom_call.1} parent=5 // pred_check
        _
      $region10: #{tpu_custom_call.1} parent=5 // pred_check_branch
        %183 = sbr.rel (%p180) target = $region12
      $region11: #{tpu_custom_call.1} parent=5 // pred_region
        %s184 = ssub.s32 %s18, 1
        // Predicated region
        $region13: #{tpu_custom_call.1} parent=11 // pred_check
          %p185 = pneg %p79
        $region14: #{tpu_custom_call.1} parent=11 // pred_check_branch
          %187 = sbr.rel (%p185) target = $region16
        $region15: #{tpu_custom_call.1} parent=11 // pred_region
          _
        $region16: #{tpu_custom_call.1} parent=11 // pred_fallthru
          _
        // Predicated region
        $region17: #{tpu_custom_call.1} parent=11 // pred_check
          %p188 = pneg %p100
        $region18: #{tpu_custom_call.1} parent=11 // pred_check_branch
          %190 = sbr.rel (%p188) target = $region20
        $region19: #{tpu_custom_call.1} parent=11 // pred_region
          %192 = vsyncadd [#allocation6], 0
          %s194 = sshll.u32 %s2, 4
          %s195 = int_to_ptr.hbm [resolvable:$true] %s194
          %s196 = sshll.u32 [#allocation5], 4
          %s197 = int_to_ptr.vmem [resolvable:$true] %s196
          %199 = dma.hbm_to_vmem [thread:$0]  %s195, 16, %s197, [#allocation6]
        $region20: #{tpu_custom_call.1} parent=11 // pred_fallthru
          _
        // Predicated region
        $region21: #{tpu_custom_call.1} parent=11 // pred_check
          %p200 = pneg %p121
        $region22: #{tpu_custom_call.1} parent=11 // pred_check_branch
          %202 = sbr.rel (%p200) target = $region24
        $region23: #{tpu_custom_call.1} parent=11 // pred_region
          _
        $region24: #{tpu_custom_call.1} parent=11 // pred_fallthru
          _
        // Predicated region
        $region25: #{tpu_custom_call.1} parent=11 // pred_check
          %p203 = pneg %p142
        $region26: #{tpu_custom_call.1} parent=11 // pred_check_branch
          %205 = sbr.rel (%p203) target = $region28
        $region27: #{tpu_custom_call.1} parent=11 // pred_region
          %207 = vsyncadd [#allocation6], 0
          %s209 = sshll.u32 %s4, 4
          %s210 = int_to_ptr.hbm [resolvable:$true] %s209
          %s211 = sshll.u32 [#allocation7], 4
          %s212 = int_to_ptr.vmem [resolvable:$true] %s211
          %214 = dma.hbm_to_vmem [thread:$0]  %s210, 32, %s212, [#allocation6]
        $region28: #{tpu_custom_call.1} parent=11 // pred_fallthru
          _
      $region12: #{tpu_custom_call.1} parent=5 // pred_fallthru
        _
      %p215 = scmp.lt.s32.totalorder %s18, 2
      // Predicated region
      $region29: #{tpu_custom_call.1} parent=5 // pred_check
        %p216 = pneg %p215
      $region30: #{tpu_custom_call.1} parent=5 // pred_check_branch
        %218 = sbr.rel (%p216) target = $region32
      $region31: #{tpu_custom_call.1} parent=5 // pred_region
        // Predicated region
        $region33: #{tpu_custom_call.1} parent=31 // pred_check
          %p219 = pneg %p52
        $region34: #{tpu_custom_call.1} parent=31 // pred_check_branch
          %221 = sbr.rel (%p219) target = $region36
        $region35: #{tpu_custom_call.1} parent=31 // pred_region
          %s222 = sand.u32 %s42, 1
          %s223 = scalar_lea.sflag [#allocation3], %s222
          %s224 = sand.u32 %s42, 1
          %s225 = smul.addr %s224, 8
          %s226 = scalar_lea.vmem [#allocation2], %s225
          %s227 = smul.u32 2, %s26
          %229 = vsyncadd %s223, 0
          %s230 = smul.addr %s25, 2
          %s231 = sadd.s32 %s227, %s230
          %s232 = smul.addr %s231, 4
          %s233 = scalar_lea.hbm %s0, %s232
          %s235 = sshll.u32 %s233, 4
          %s236 = int_to_ptr.hbm [resolvable:$true] %s235
          %s237 = sshll.u32 %s226, 4
          %s238 = int_to_ptr.vmem [resolvable:$true] %s237
          %240 = dma.hbm_to_vmem [thread:$0]  %s236, 128, %s238, %s223
        $region36: #{tpu_custom_call.1} parent=31 // pred_fallthru
          _
      $region32: #{tpu_custom_call.1} parent=5 // pred_fallthru
        _
      %p241 = scmp.le.s32.totalorder 1, %s18
      %p242 = scmp.lt.s32.totalorder %s18, 3
      %p243 = pnand %p241, %p242
      %p244 = pneg %p243
      // Predicated region
      $region37: #{tpu_custom_call.1} parent=5 // pred_check
        _
      $region38: #{tpu_custom_call.1} parent=5 // pred_check_branch
        %246 = sbr.rel (%p243) target = $region40
      $region39: #{tpu_custom_call.1} parent=5 // pred_region
        %s247 = ssub.s32 %s18, 1
        %s248 = sand.u32 %s45, 1
        %s249 = scalar_lea.sflag [#allocation3], %s248
        %s250 = sand.u32 %s45, 1
        %s251 = smul.addr %s250, 8
        %s252 = scalar_lea.vmem [#allocation2], %s251
        // Predicated region
        $region41: #{tpu_custom_call.1} parent=39 // pred_check
          %p253 = pneg %p58
        $region42: #{tpu_custom_call.1} parent=39 // pred_check_branch
          %255 = sbr.rel (%p253) target = $region44
        $region43: #{tpu_custom_call.1} parent=39 // pred_region
          %257 = dma.done %s249, 128
        $region44: #{tpu_custom_call.1} parent=39 // pred_fallthru
          _
        // Predicated region
        $region45: #{tpu_custom_call.1} parent=39 // pred_check
          %p258 = pneg %p100
        $region46: #{tpu_custom_call.1} parent=39 // pred_check_branch
          %260 = sbr.rel (%p258) target = $region48
        $region47: #{tpu_custom_call.1} parent=39 // pred_region
          %262 = dma.done [#allocation6], 16
        $region48: #{tpu_custom_call.1} parent=39 // pred_fallthru
          _
        // Predicated region
        $region49: #{tpu_custom_call.1} parent=39 // pred_check
          %p263 = pneg %p142
        $region50: #{tpu_custom_call.1} parent=39 // pred_check_branch
          %265 = sbr.rel (%p263) target = $region52
        $region51: #{tpu_custom_call.1} parent=39 // pred_region
          %267 = dma.done [#allocation6], 32
        $region52: #{tpu_custom_call.1} parent=39 // pred_fallthru
          _
        %s268 = sand.u32 %s45, 1
        %s269 = scalar_lea.sflag [#allocation3], %s268
        %s270 = sand.u32 %s45, 1
        %s271 = smul.addr %s270, 8
        %s272 = scalar_lea.vmem [#allocation2], %s271
        %p273 = pneg %p58
        %p274 = pneg %p55
        %p275 = pneg %p79
        %p276 = pneg %p76
        %p277 = pneg %p100
        %p278 = pneg %p97
        %p279 = pneg %p121
        %p280 = pneg %p118
        %p281 = pneg %p142
        %p282 = pneg %p139
        %p283 = pneg %p170
        %p284 = pneg %p167
        %s285 = sand.u32 %s157, 1
        %s286 = scalar_lea.sflag [#allocation4], %s285
        %s287 = sand.u32 %s157, 1
        %s288 = smul.addr %s287, 2
        %s289 = scalar_lea.vmem [#allocation8], %s288
        %s290 = smul.u32 2, %s28
        %v291 = vld [vmem:[%s252] sm:$0xff]
        %v292 = vld [vmem:[%s1] sm:$0xf]
        %v293 = vld [vmem:[#allocation5] sm:$0x1]
        %v295 = vperm.slane %v293, 0
        %298 = vst [vmem:[#allocation1] ss:$2 sm:$0xff] %v291
        %v299 = vld.sshfl [vmem:[#allocation1] sm:$0xff pattern:$0x75316420]
        %v300 = vld.sshfl [vmem:[#allocation1 + $0x8] sm:$0xff pattern:$0x75316420]
        %303 = vxpose.xlu0.b32.start [1/16] %v299, 128
        %304 = vxpose.xlu0.b32.cont [2/16] 0.0, 128
        %305 = vxpose.xlu0.b32.cont [3/16] 0.0, 128
        %306 = vxpose.xlu0.b32.cont [4/16] 0.0, 128
        %307 = vxpose.xlu0.b32.cont [5/16] 0.0, 128
        %308 = vxpose.xlu0.b32.cont [6/16] 0.0, 128
        %309 = vxpose.xlu0.b32.cont [7/16] 0.0, 128
        %310 = vxpose.xlu0.b32.cont [8/16] 0.0, 128
        %311 = vxpose.xlu0.b32.cont [9/16] 0.0, 128
        %312 = vxpose.xlu0.b32.cont [10/16] 0.0, 128
        %313 = vxpose.xlu0.b32.cont [11/16] 0.0, 128
        %314 = vxpose.xlu0.b32.cont [12/16] 0.0, 128
        %315 = vxpose.xlu0.b32.cont [13/16] 0.0, 128
        %316 = vxpose.xlu0.b32.cont [14/16] 0.0, 128
        %317 = vxpose.xlu0.b32.cont [15/16] 0.0, 128
        %318 = vxpose.xlu0.b32.end [16/16] 0.0, 128
        %v319 = vpop.trf.xlu0
        %v320 = vpop.trf.xlu0
        %v321 = vpop.trf.xlu0
        %v322 = vpop.trf.xlu0
        %v323 = vpop.trf.xlu0
        %v324 = vpop.trf.xlu0
        %v325 = vpop.trf.xlu0
        %v326 = vpop.trf.xlu0
        %v327 = vpop.trf.xlu0
        %v328 = vpop.trf.xlu0
        %v329 = vpop.trf.xlu0
        %v330 = vpop.trf.xlu0
        %v331 = vpop.trf.xlu0
        %v332 = vpop.trf.xlu0
        %v333 = vpop.trf.xlu0
        %v334 = vpop.trf.xlu0
        %335 = vxpose.xlu0.b32.start [1/16] %v300, 128
        %336 = vxpose.xlu0.b32.cont [2/16] 0.0, 128
        %337 = vxpose.xlu0.b32.cont [3/16] 0.0, 128
        %338 = vxpose.xlu0.b32.cont [4/16] 0.0, 128
        %339 = vxpose.xlu0.b32.cont [5/16] 0.0, 128
        %340 = vxpose.xlu0.b32.cont [6/16] 0.0, 128
        %341 = vxpose.xlu0.b32.cont [7/16] 0.0, 128
        %342 = vxpose.xlu0.b32.cont [8/16] 0.0, 128
        %343 = vxpose.xlu0.b32.cont [9/16] 0.0, 128
        %344 = vxpose.xlu0.b32.cont [10/16] 0.0, 128
        %345 = vxpose.xlu0.b32.cont [11/16] 0.0, 128
        %346 = vxpose.xlu0.b32.cont [12/16] 0.0, 128
        %347 = vxpose.xlu0.b32.cont [13/16] 0.0, 128
        %348 = vxpose.xlu0.b32.cont [14/16] 0.0, 128
        %349 = vxpose.xlu0.b32.cont [15/16] 0.0, 128
        %350 = vxpose.xlu0.b32.end [16/16] 0.0, 128
        %v351 = vpop.trf.xlu0
        %v352 = vpop.trf.xlu0
        %v353 = vpop.trf.xlu0
        %v354 = vpop.trf.xlu0
        %v355 = vpop.trf.xlu0
        %v356 = vpop.trf.xlu0
        %v357 = vpop.trf.xlu0
        %v358 = vpop.trf.xlu0
        %v359 = vpop.trf.xlu0
        %v360 = vpop.trf.xlu0
        %v361 = vpop.trf.xlu0
        %v362 = vpop.trf.xlu0
        %v363 = vpop.trf.xlu0
        %v364 = vpop.trf.xlu0
        %v365 = vpop.trf.xlu0
        %v366 = vpop.trf.xlu0
        %vm367 = vcmask 31744
        %v369 = vsel %vm367, %v319, 0
        %v372 = vsel %vm367, %v320, 0
        %v375 = vsel %vm367, %v321, 0
        %v378 = vsel %vm367, %v322, 0
        %v381 = vsel %vm367, %v323, 0
        %v384 = vsel %vm367, %v324, 0
        %v387 = vsel %vm367, %v325, 0
        %v390 = vsel %vm367, %v326, 0
        %v393 = vsel %vm367, %v327, 0
        %v396 = vsel %vm367, %v328, 0
        %v399 = vsel %vm367, %v329, 0
        %v402 = vsel %vm367, %v330, 0
        %v405 = vsel %vm367, %v331, 0
        %v408 = vsel %vm367, %v332, 0
        %v411 = vsel %vm367, %v333, 0
        %v414 = vsel %vm367, %v334, 0
        %v417 = vsel %vm367, %v351, 0
        %v420 = vsel %vm367, %v352, 0
        %v423 = vsel %vm367, %v353, 0
        %v426 = vsel %vm367, %v354, 0
        %v429 = vsel %vm367, %v355, 0
        %v432 = vsel %vm367, %v356, 0
        %v435 = vsel %vm367, %v357, 0
        %v438 = vsel %vm367, %v358, 0
        %v441 = vsel %vm367, %v359, 0
        %v444 = vsel %vm367, %v360, 0
        %v447 = vsel %vm367, %v361, 0
        %v450 = vsel %vm367, %v362, 0
        %v453 = vsel %vm367, %v363, 0
        %v456 = vsel %vm367, %v364, 0
        %v459 = vsel %vm367, %v365, 0
        %v462 = vsel %vm367, %v366, 0
        %vm464 = vcmask 1043456
        %v466 = vsel %vm464, %v292, 0
        %468 = vmatpush.msra.mxu0 0.0
        %469 = vmatpush.msra.mxu0 0.0
        %470 = vmatpush.msra.mxu0 0.0
        %471 = vmatpush.msra.mxu0 0.0
        %472 = vmatpush.msra.mxu0 0.0
        %473 = vmatpush.msra.mxu0 0.0
        %474 = vmatpush.msra.mxu0 0.0
        %475 = vmatpush.msra.mxu0 0.0
        %476 = vmatpush.msra.mxu0 0.0
        %477 = vmatpush.msra.mxu0 0.0
        %478 = vmatpush.msra.mxu0 0.0
        %479 = vmatpush.msra.mxu0 0.0
        %480 = vmatpush.msra.mxu0 0.0
        %481 = vmatpush.msra.mxu0 0.0
        %482 = vmatpush.msra.mxu0 0.0
        %483 = vmatpush.msra.mxu0 %v466
        %484 = vmatmul.f32.gmra.mxu0 %v369
        %v485 = vpop.f32.mrf.mxu0
        %v486 = vadd.f32 %v295, %v485
        %487 = vmatmul.f32.gmra.mxu0 %v372
        %v488 = vpop.f32.mrf.mxu0
        %v489 = vadd.f32 %v295, %v488
        %490 = vmatmul.f32.gmra.mxu0 %v375
        %v491 = vpop.f32.mrf.mxu0
        %v492 = vadd.f32 %v295, %v491
        %493 = vmatmul.f32.gmra.mxu0 %v378
        %v494 = vpop.f32.mrf.mxu0
        %v495 = vadd.f32 %v295, %v494
        %496 = vmatmul.f32.gmra.mxu0 %v381
        %v497 = vpop.f32.mrf.mxu0
        %v498 = vadd.f32 %v295, %v497
        %499 = vmatmul.f32.gmra.mxu0 %v384
        %v500 = vpop.f32.mrf.mxu0
        %v501 = vadd.f32 %v295, %v500
        %502 = vmatmul.f32.gmra.mxu0 %v387
        %v503 = vpop.f32.mrf.mxu0
        %v504 = vadd.f32 %v295, %v503
        %505 = vmatmul.f32.gmra.mxu0 %v390
        %v506 = vpop.f32.mrf.mxu0
        %v507 = vadd.f32 %v295, %v506
        %508 = vmatmul.f32.gmra.mxu0 %v393
        %v509 = vpop.f32.mrf.mxu0
        %v510 = vadd.f32 %v295, %v509
        %511 = vmatmul.f32.gmra.mxu0 %v396
        %v512 = vpop.f32.mrf.mxu0
        %v513 = vadd.f32 %v295, %v512
        %514 = vmatmul.f32.gmra.mxu0 %v399
        %v515 = vpop.f32.mrf.mxu0
        %v516 = vadd.f32 %v295, %v515
        %517 = vmatmul.f32.gmra.mxu0 %v402
        %v518 = vpop.f32.mrf.mxu0
        %v519 = vadd.f32 %v295, %v518
        %520 = vmatmul.f32.gmra.mxu0 %v405
        %v521 = vpop.f32.mrf.mxu0
        %v522 = vadd.f32 %v295, %v521
        %523 = vmatmul.f32.gmra.mxu0 %v408
        %v524 = vpop.f32.mrf.mxu0
        %v525 = vadd.f32 %v295, %v524
        %526 = vmatmul.f32.gmra.mxu0 %v411
        %v527 = vpop.f32.mrf.mxu0
        %v528 = vadd.f32 %v295, %v527
        %529 = vmatmul.f32.gmra.mxu0 %v414
        %v530 = vpop.f32.mrf.mxu0
        %v531 = vadd.f32 %v295, %v530
        %532 = vmatmul.f32.gmra.mxu0 %v417
        %v533 = vpop.f32.mrf.mxu0
        %v534 = vadd.f32 %v295, %v533
        %535 = vmatmul.f32.gmra.mxu0 %v420
        %v536 = vpop.f32.mrf.mxu0
        %v537 = vadd.f32 %v295, %v536
        %538 = vmatmul.f32.gmra.mxu0 %v423
        %v539 = vpop.f32.mrf.mxu0
        %v540 = vadd.f32 %v295, %v539
        %541 = vmatmul.f32.gmra.mxu0 %v426
        %v542 = vpop.f32.mrf.mxu0
        %v543 = vadd.f32 %v295, %v542
        %544 = vmatmul.f32.gmra.mxu0 %v429
        %v545 = vpop.f32.mrf.mxu0
        %v546 = vadd.f32 %v295, %v545
        %547 = vmatmul.f32.gmra.mxu0 %v432
        %v548 = vpop.f32.mrf.mxu0
        %v549 = vadd.f32 %v295, %v548
        %550 = vmatmul.f32.gmra.mxu0 %v435
        %v551 = vpop.f32.mrf.mxu0
        %v552 = vadd.f32 %v295, %v551
        %553 = vmatmul.f32.gmra.mxu0 %v438
        %v554 = vpop.f32.mrf.mxu0
        %v555 = vadd.f32 %v295, %v554
        %556 = vmatmul.f32.gmra.mxu0 %v441
        %v557 = vpop.f32.mrf.mxu0
        %v558 = vadd.f32 %v295, %v557
        %559 = vmatmul.f32.gmra.mxu0 %v444
        %v560 = vpop.f32.mrf.mxu0
        %v561 = vadd.f32 %v295, %v560
        %562 = vmatmul.f32.gmra.mxu0 %v447
        %v563 = vpop.f32.mrf.mxu0
        %v564 = vadd.f32 %v295, %v563
        %565 = vmatmul.f32.gmra.mxu0 %v450
        %v566 = vpop.f32.mrf.mxu0
        %v567 = vadd.f32 %v295, %v566
        %568 = vmatmul.f32.gmra.mxu0 %v453
        %v569 = vpop.f32.mrf.mxu0
        %v570 = vadd.f32 %v295, %v569
        %571 = vmatmul.f32.gmra.mxu0 %v456
        %v572 = vpop.f32.mrf.mxu0
        %v573 = vadd.f32 %v295, %v572
        %574 = vmatmul.f32.gmra.mxu0 %v459
        %v575 = vpop.f32.mrf.mxu0
        %v576 = vadd.f32 %v295, %v575
        %577 = vmatmul.f32.gmra.mxu0 %v462
        %v578 = vpop.f32.mrf.mxu0
        %v579 = vadd.f32 %v295, %v578
        %580 = vdwg.mxu0
        %v581 = vmax.f32 %v486, 0.0
        %v582 = vmax.f32 %v489, 0.0
        %v583 = vmax.f32 %v492, 0.0
        %v584 = vmax.f32 %v495, 0.0
        %v585 = vmax.f32 %v498, 0.0
        %v586 = vmax.f32 %v501, 0.0
        %v587 = vmax.f32 %v504, 0.0
        %v588 = vmax.f32 %v507, 0.0
        %v589 = vmax.f32 %v510, 0.0
        %v590 = vmax.f32 %v513, 0.0
        %v591 = vmax.f32 %v516, 0.0
        %v592 = vmax.f32 %v519, 0.0
        %v593 = vmax.f32 %v522, 0.0
        %v594 = vmax.f32 %v525, 0.0
        %v595 = vmax.f32 %v528, 0.0
        %v596 = vmax.f32 %v531, 0.0
        %v597 = vmax.f32 %v534, 0.0
        %v598 = vmax.f32 %v537, 0.0
        %v599 = vmax.f32 %v540, 0.0
        %v600 = vmax.f32 %v543, 0.0
        %v601 = vmax.f32 %v546, 0.0
        %v602 = vmax.f32 %v549, 0.0
        %v603 = vmax.f32 %v552, 0.0
        %v604 = vmax.f32 %v555, 0.0
        %v605 = vmax.f32 %v558, 0.0
        %v606 = vmax.f32 %v561, 0.0
        %v607 = vmax.f32 %v564, 0.0
        %v608 = vmax.f32 %v567, 0.0
        %v609 = vmax.f32 %v570, 0.0
        %v610 = vmax.f32 %v573, 0.0
        %v611 = vmax.f32 %v576, 0.0
        %v612 = vmax.f32 %v579, 0.0
        %v613 = vld [vmem:[%s3] sm:$0xff]
        %vm614 = vcmask 261120
        %v616 = vsel %vm614, %v613, 0
        %618 = vmatpush.msra.mxu0 0.0
        %619 = vmatpush.msra.mxu0 0.0
        %620 = vmatpush.msra.mxu0 0.0
        %621 = vmatpush.msra.mxu0 0.0
        %622 = vmatpush.msra.mxu0 0.0
        %623 = vmatpush.msra.mxu0 0.0
        %624 = vmatpush.msra.mxu0 0.0
        %625 = vmatpush.msra.mxu0 0.0
        %626 = vmatpush.msra.mxu0 0.0
        %627 = vmatpush.msra.mxu0 0.0
        %628 = vmatpush.msra.mxu0 0.0
        %629 = vmatpush.msra.mxu0 0.0
        %630 = vmatpush.msra.mxu0 %v584
        %631 = vmatpush.msra.mxu0 %v583
        %632 = vmatpush.msra.mxu0 %v582
        %633 = vmatpush.msra.mxu0 %v581
        %634 = vmatmul.f32.gmra.mxu0 %v616
        %v635 = vpop.f32.mrf.mxu0
        %v636 = vadd.f32 0.0, %v635
        %637 = vdwg.mxu0
        %638 = vmatpush.msra.mxu0 0.0
        %639 = vmatpush.msra.mxu0 0.0
        %640 = vmatpush.msra.mxu0 0.0
        %641 = vmatpush.msra.mxu0 0.0
        %642 = vmatpush.msra.mxu0 0.0
        %643 = vmatpush.msra.mxu0 0.0
        %644 = vmatpush.msra.mxu0 0.0
        %645 = vmatpush.msra.mxu0 0.0
        %646 = vmatpush.msra.mxu0 0.0
        %647 = vmatpush.msra.mxu0 0.0
        %648 = vmatpush.msra.mxu0 0.0
        %649 = vmatpush.msra.mxu0 0.0
        %650 = vmatpush.msra.mxu0 %v588
        %651 = vmatpush.msra.mxu0 %v587
        %652 = vmatpush.msra.mxu0 %v586
        %653 = vmatpush.msra.mxu0 %v585
        %654 = vmatmul.f32.gmra.mxu0 %v616
        %v655 = vpop.f32.mrf.mxu0
        %v656 = vadd.f32 0.0, %v655
        %657 = vdwg.mxu0
        %658 = vmatpush.msra.mxu0 0.0
        %659 = vmatpush.msra.mxu0 0.0
        %660 = vmatpush.msra.mxu0 0.0
        %661 = vmatpush.msra.mxu0 0.0
        %662 = vmatpush.msra.mxu0 0.0
        %663 = vmatpush.msra.mxu0 0.0
        %664 = vmatpush.msra.mxu0 0.0
        %665 = vmatpush.msra.mxu0 0.0
        %666 = vmatpush.msra.mxu0 0.0
        %667 = vmatpush.msra.mxu0 0.0
        %668 = vmatpush.msra.mxu0 0.0
        %669 = vmatpush.msra.mxu0 0.0
        %670 = vmatpush.msra.mxu0 %v592
        %671 = vmatpush.msra.mxu0 %v591
        %672 = vmatpush.msra.mxu0 %v590
        %673 = vmatpush.msra.mxu0 %v589
        %674 = vmatmul.f32.gmra.mxu0 %v616
        %v675 = vpop.f32.mrf.mxu0
        %v676 = vadd.f32 0.0, %v675
        %677 = vdwg.mxu0
        %678 = vmatpush.msra.mxu0 0.0
        %679 = vmatpush.msra.mxu0 0.0
        %680 = vmatpush.msra.mxu0 0.0
        %681 = vmatpush.msra.mxu0 0.0
        %682 = vmatpush.msra.mxu0 0.0
        %683 = vmatpush.msra.mxu0 0.0
        %684 = vmatpush.msra.mxu0 0.0
        %685 = vmatpush.msra.mxu0 0.0
        %686 = vmatpush.msra.mxu0 0.0
        %687 = vmatpush.msra.mxu0 0.0
        %688 = vmatpush.msra.mxu0 0.0
        %689 = vmatpush.msra.mxu0 0.0
        %690 = vmatpush.msra.mxu0 %v596
        %691 = vmatpush.msra.mxu0 %v595
        %692 = vmatpush.msra.mxu0 %v594
        %693 = vmatpush.msra.mxu0 %v593
        %694 = vmatmul.f32.gmra.mxu0 %v616
        %v695 = vpop.f32.mrf.mxu0
        %v696 = vadd.f32 0.0, %v695
        %697 = vdwg.mxu0
        %698 = vmatpush.msra.mxu0 0.0
        %699 = vmatpush.msra.mxu0 0.0
        %700 = vmatpush.msra.mxu0 0.0
        %701 = vmatpush.msra.mxu0 0.0
        %702 = vmatpush.msra.mxu0 0.0
        %703 = vmatpush.msra.mxu0 0.0
        %704 = vmatpush.msra.mxu0 0.0
        %705 = vmatpush.msra.mxu0 0.0
        %706 = vmatpush.msra.mxu0 0.0
        %707 = vmatpush.msra.mxu0 0.0
        %708 = vmatpush.msra.mxu0 0.0
        %709 = vmatpush.msra.mxu0 0.0
        %710 = vmatpush.msra.mxu0 %v600
        %711 = vmatpush.msra.mxu0 %v599
        %712 = vmatpush.msra.mxu0 %v598
        %713 = vmatpush.msra.mxu0 %v597
        %714 = vmatmul.f32.gmra.mxu0 %v616
        %v715 = vpop.f32.mrf.mxu0
        %v716 = vadd.f32 0.0, %v715
        %717 = vdwg.mxu0
        %718 = vmatpush.msra.mxu0 0.0
        %719 = vmatpush.msra.mxu0 0.0
        %720 = vmatpush.msra.mxu0 0.0
        %721 = vmatpush.msra.mxu0 0.0
        %722 = vmatpush.msra.mxu0 0.0
        %723 = vmatpush.msra.mxu0 0.0
        %724 = vmatpush.msra.mxu0 0.0
        %725 = vmatpush.msra.mxu0 0.0
        %726 = vmatpush.msra.mxu0 0.0
        %727 = vmatpush.msra.mxu0 0.0
        %728 = vmatpush.msra.mxu0 0.0
        %729 = vmatpush.msra.mxu0 0.0
        %730 = vmatpush.msra.mxu0 %v604
        %731 = vmatpush.msra.mxu0 %v603
        %732 = vmatpush.msra.mxu0 %v602
        %733 = vmatpush.msra.mxu0 %v601
        %734 = vmatmul.f32.gmra.mxu0 %v616
        %v735 = vpop.f32.mrf.mxu0
        %v736 = vadd.f32 0.0, %v735
        %737 = vdwg.mxu0
        %738 = vmatpush.msra.mxu0 0.0
        %739 = vmatpush.msra.mxu0 0.0
        %740 = vmatpush.msra.mxu0 0.0
        %741 = vmatpush.msra.mxu0 0.0
        %742 = vmatpush.msra.mxu0 0.0
        %743 = vmatpush.msra.mxu0 0.0
        %744 = vmatpush.msra.mxu0 0.0
        %745 = vmatpush.msra.mxu0 0.0
        %746 = vmatpush.msra.mxu0 0.0
        %747 = vmatpush.msra.mxu0 0.0
        %748 = vmatpush.msra.mxu0 0.0
        %749 = vmatpush.msra.mxu0 0.0
        %750 = vmatpush.msra.mxu0 %v608
        %751 = vmatpush.msra.mxu0 %v607
        %752 = vmatpush.msra.mxu0 %v606
        %753 = vmatpush.msra.mxu0 %v605
        %754 = vmatmul.f32.gmra.mxu0 %v616
        %v755 = vpop.f32.mrf.mxu0
        %v756 = vadd.f32 0.0, %v755
        %757 = vdwg.mxu0
        %758 = vmatpush.msra.mxu0 0.0
        %759 = vmatpush.msra.mxu0 0.0
        %760 = vmatpush.msra.mxu0 0.0
        %761 = vmatpush.msra.mxu0 0.0
        %762 = vmatpush.msra.mxu0 0.0
        %763 = vmatpush.msra.mxu0 0.0
        %764 = vmatpush.msra.mxu0 0.0
        %765 = vmatpush.msra.mxu0 0.0
        %766 = vmatpush.msra.mxu0 0.0
        %767 = vmatpush.msra.mxu0 0.0
        %768 = vmatpush.msra.mxu0 0.0
        %769 = vmatpush.msra.mxu0 0.0
        %770 = vmatpush.msra.mxu0 %v612
        %771 = vmatpush.msra.mxu0 %v611
        %772 = vmatpush.msra.mxu0 %v610
        %773 = vmatpush.msra.mxu0 %v609
        %774 = vmatmul.f32.gmra.mxu0 %v616
        %v775 = vpop.f32.mrf.mxu0
        %v776 = vadd.f32 0.0, %v775
        %777 = vdwg.mxu0
        %v778 = vld [vmem:[#allocation7] sm:$0x3]
        %vm779 = vcmask 15360
        %v781 = vsel %vm779, %v778, 0
        %v784 = vsel %vm779, %v636, 0
        %v787 = vsel %vm779, %v656, 0
        %v790 = vsel %vm779, %v676, 0
        %v793 = vsel %vm779, %v696, 0
        %v796 = vsel %vm779, %v716, 0
        %v799 = vsel %vm779, %v736, 0
        %v802 = vsel %vm779, %v756, 0
        %v805 = vsel %vm779, %v776, 0
        %807 = vmatpush.xpose.msra.mxu0 0.0
        %808 = vmatpush.xpose.msra.mxu0 0.0
        %809 = vmatpush.xpose.msra.mxu0 0.0
        %810 = vmatpush.xpose.msra.mxu0 0.0
        %811 = vmatpush.xpose.msra.mxu0 0.0
        %812 = vmatpush.xpose.msra.mxu0 0.0
        %813 = vmatpush.xpose.msra.mxu0 0.0
        %814 = vmatpush.xpose.msra.mxu0 0.0
        %815 = vmatpush.xpose.msra.mxu0 %v805
        %816 = vmatpush.xpose.msra.mxu0 %v802
        %817 = vmatpush.xpose.msra.mxu0 %v799
        %818 = vmatpush.xpose.msra.mxu0 %v796
        %819 = vmatpush.xpose.msra.mxu0 %v793
        %820 = vmatpush.xpose.msra.mxu0 %v790
        %821 = vmatpush.xpose.msra.mxu0 %v787
        %822 = vmatpush.xpose.msra.mxu0 %v784
        %823 = vmatmul.f32.gmra.mxu0 %v781
        %v824 = vpop.f32.mrf.mxu0
        %v825 = vadd.f32 0.0, %v824
        %826 = vdwg.mxu0
        %vm827 = vcmask 517120
        %828 = vst.msk [vmem:[%s289] sm:$0x3] %vm827, %v825
        %s829 = sand.u32 %s157, 1
        %s830 = scalar_lea.sflag [#allocation4], %s829
        %s831 = sand.u32 %s157, 1
        %s832 = smul.addr %s831, 2
        %s833 = scalar_lea.vmem [#allocation8], %s832
        // Predicated region
        $region53: #{tpu_custom_call.1} parent=39 // pred_check
          %p834 = pneg %p167
        $region54: #{tpu_custom_call.1} parent=39 // pred_check_branch
          %836 = sbr.rel (%p834) target = $region56
        $region55: #{tpu_custom_call.1} parent=39 // pred_region
          %838 = vsyncadd %s830, 0
          %s839 = sadd.s32 %s28, %s27
          %s840 = smul.addr %s839, 2
          %s841 = scalar_lea.hbm %s5, %s840
          %s843 = sshll.u32 %s833, 4
          %s844 = int_to_ptr.vmem [resolvable:$true] %s843
          %s845 = sshll.u32 %s841, 4
          %s846 = int_to_ptr.hbm [resolvable:$true] %s845
          %848 = dma.vmem_to_hbm [thread:$0]  %s844, 32, %s846, %s830
        $region56: #{tpu_custom_call.1} parent=39 // pred_fallthru
          _
      $region40: #{tpu_custom_call.1} parent=5 // pred_fallthru
        _
      %p849 = scmp.le.s32.totalorder 2, %s18
      // Predicated region
      $region57: #{tpu_custom_call.1} parent=5 // pred_check
        %p850 = pneg %p849
      $region58: #{tpu_custom_call.1} parent=5 // pred_check_branch
        %852 = sbr.rel (%p850) target = $region60
      $region59: #{tpu_custom_call.1} parent=5 // pred_region
        %s853 = ssub.s32 %s18, 2
        // Predicated region
        $region61: #{tpu_custom_call.1} parent=59 // pred_check
          %p854 = pneg %p173
        $region62: #{tpu_custom_call.1} parent=59 // pred_check_branch
          %856 = sbr.rel (%p854) target = $region64
        $region63: #{tpu_custom_call.1} parent=59 // pred_region
          %s857 = sand.u32 %s158, 1
          %s858 = scalar_lea.sflag [#allocation4], %s857
          %s859 = sand.u32 %s158, 1
          %s860 = smul.addr %s859, 2
          %s861 = scalar_lea.vmem [#allocation8], %s860
          %863 = dma.done %s858, 32
        $region64: #{tpu_custom_call.1} parent=59 // pred_fallthru
          _
      $region60: #{tpu_custom_call.1} parent=5 // pred_fallthru
        _
    $region6: #{tpu_custom_call.1} parent=1 // loop_footer
      %s22 = sadd.s32 1, %s18
    $region7: #{tpu_custom_call.1} parent=1 // loop_footer_branch
      %17 = sbr.rel target = $region3
    $region8: #{tpu_custom_call.1} parent=1 // loop_exit
      _
    %864 = vsyncpa [#allocation3], 1
    %s865 = scalar_lea.sflag [#allocation3], 1
    %866 = vsyncpa %s865, 1
    %867 = vsyncpa [#allocation6], 1
    %868 = vsyncpa [#allocation4], 1
    %s869 = scalar_lea.sflag [#allocation4], 1
    %870 = vsyncpa %s869, 1

</llo_original>
